<compile_context>
chip_gen: v5e
topology: v5e:2x2
jax: 0.10.0
libtpu: 0.0.40
codegen_flags: <defaults>
</compile_context>

<pallas_src>
import jax
import jax.numpy as jnp
from jax.experimental import pallas as pl
from jax.experimental.pallas import tpu as pltpu


def _dequant_kernel(q_ref, scale_ref, zp_ref, o_ref):
    # Elementwise dequantize of one (bm, bn) tile on the VPU.
    q = q_ref[...].astype(jnp.float32)                      # i8 -> f32
    out = (q - zp_ref[...]) * scale_ref[...]                 # (bm,1) bcast over lanes
    o_ref[...] = out.astype(o_ref.dtype)


def _pick_tiles(M: int, N: int, out_itemsize: int):
    """Pick large, int8-aligned tiles whose double-buffered working set fits
    the smallest scoped-VMEM default (v5e: 16 MiB) with headroom."""
    # Lane dim: full row width when modest -> 1 column block, lane-dense store.
    bn = N if N <= 2048 else 2048

    budget = 12 << 20                         # bytes, < 16 MiB scoped default
    per_elem = (1 + out_itemsize) * 2         # int8 in + out, double-buffered
    bm_cap = max(8, budget // (bn * per_elem))
    bm = min(M, bm_cap)
    if bm >= 32:
        bm = (bm // 32) * 32                  # int8 sublane pack factor (32,128)
    elif bm >= 8:
        bm = (bm // 8) * 8                    # f32 sublane alignment
    else:
        bm = M                                # tiny M: block == full dim
    return bm, bn


def leafq_decode(value: jax.Array, scale: jax.Array, zero_point: jax.Array,
                 *, out_dtype=jnp.float32) -> jax.Array:
    """Pallas implementation of LeafQ.forward(): affine int8 dequantization."""
    M, N = value.shape
    out_itemsize = jnp.dtype(out_dtype).itemsize
    bm, bn = _pick_tiles(M, N, out_itemsize)
    grid = (pl.cdiv(M, bm), pl.cdiv(N, bn))

    cost = pl.CostEstimate(
        flops=2 * M * N,                                     # sub + mul
        transcendentals=0,
        bytes_accessed=M * N * (1 + out_itemsize) + 2 * M * 4,
    )

    return pl.pallas_call(
        _dequant_kernel,
        out_shape=jax.ShapeDtypeStruct((M, N), out_dtype),
        grid_spec=pltpu.PrefetchScalarGridSpec(
            num_scalar_prefetch=0,
            grid=grid,
            in_specs=[
                pl.BlockSpec((bm, bn), lambda i, j: (i, j)),  # quantized value
                pl.BlockSpec((bm, 1), lambda i, j: (i, 0)),   # per-row scale
                pl.BlockSpec((bm, 1), lambda i, j: (i, 0)),   # per-row zero point
            ],
            out_specs=pl.BlockSpec((bm, bn), lambda i, j: (i, j)),
        ),
        compiler_params=pltpu.CompilerParams(
            dimension_semantics=("parallel", "parallel")),
        cost_estimate=cost,
    )(value, scale, zero_point)


class LeafQ:
    """JAX analogue of the PyTorch LeafQ module (affine int8 QFunction)."""

    def __init__(self, shape, key, out_dtype=jnp.float32):
        k_val, k_scale, k_zp = jax.random.split(key, 3)
        self.out_dtype = out_dtype
        # Deterministic synthetic "quantized" buffer + decode parameters.
        self.value = jax.random.randint(k_val, shape, -128, 128,
                                        dtype=jnp.int32).astype(jnp.int8)
        self.scale = jax.random.uniform(k_scale, (shape[0], 1),
                                        minval=0.01, maxval=0.1,
                                        dtype=jnp.float32)
        self.zero_point = jax.random.randint(k_zp, (shape[0], 1), -8, 8,
                                             dtype=jnp.int32).astype(jnp.float32)

    def forward(self) -> jax.Array:
        return leafq_decode(self.value, self.scale, self.zero_point,
                            out_dtype=self.out_dtype)


if __name__ == "__main__":
    key = jax.random.PRNGKey(0)
    # Small shape consistent with a quantized weight leaf:
    # [C_out=64, C_in=512]  (int8-aligned: 64 % 32 == 0, 512 % 128 == 0)
    module = LeafQ((64, 512), key)

    out = jax.block_until_ready(module.forward())

    # Reference check in plain JAX.
    ref = (module.value.astype(jnp.float32) - module.zero_point) * module.scale
    assert out.shape == (64, 512) and out.dtype == jnp.float32
    assert jnp.allclose(out, ref, atol=1e-6), "mismatch vs reference decode"

    print("KERNEL_OK")
</pallas_src>

<mosaic_0001>
module attributes {stable_mosaic.version = 11 : i64} {
  func.func @_dequant_kernel(%arg0: i32, %arg1: i32, %arg2: memref<64x512xi8, #tpu.memory_space<vmem>>, %arg3: memref<64x1xf32, #tpu.memory_space<vmem>>, %arg4: memref<64x1xf32, #tpu.memory_space<vmem>>, %arg5: memref<64x512xf32, #tpu.memory_space<vmem>>) attributes {dimension_semantics = [#tpu.dimension_semantics<parallel>, #tpu.dimension_semantics<parallel>], iteration_bounds = array<i64: 1, 1>, scalar_prefetch = 0 : i64, scratch_operands = 0 : i64, tpu.core_type = #tpu.core_type<tc>, window_params = [{transform_indices = @transform_0, window_bounds = array<i64: 64, 512>}, {transform_indices = @transform_1, window_bounds = array<i64: 64, 1>}, {transform_indices = @transform_2, window_bounds = array<i64: 64, 1>}, {transform_indices = @transform_3, window_bounds = array<i64: 64, 512>}]} {
    %c0 = arith.constant 0 : index
    %c0_0 = arith.constant 0 : index
    %0 = vector.load %arg2[%c0, %c0_0] : memref<64x512xi8, #tpu.memory_space<vmem>>, vector<64x512xi8>
    %1 = arith.sitofp %0 : vector<64x512xi8> to vector<64x512xf32>
    %c0_1 = arith.constant 0 : index
    %c0_2 = arith.constant 0 : index
    %2 = vector.load %arg4[%c0_1, %c0_2] : memref<64x1xf32, #tpu.memory_space<vmem>>, vector<64x1xf32>
    %3 = vector.broadcast %2 : vector<64x1xf32> to vector<64x512xf32>
    %4 = arith.subf %1, %3 : vector<64x512xf32>
    %c0_3 = arith.constant 0 : index
    %c0_4 = arith.constant 0 : index
    %5 = vector.load %arg3[%c0_3, %c0_4] : memref<64x1xf32, #tpu.memory_space<vmem>>, vector<64x1xf32>
    %6 = vector.broadcast %5 : vector<64x1xf32> to vector<64x512xf32>
    %7 = arith.mulf %4, %6 : vector<64x512xf32>
    %c0_5 = arith.constant 0 : index
    %c0_6 = arith.constant 0 : index
    %8 = vector.load %arg5[%c0_5, %c0_6] : memref<64x512xf32, #tpu.memory_space<vmem>>, vector<64x512xf32>
    tpu.vector_store %arg5[%c0_5, %c0_6], %7 {strides = array<i32>} : memref<64x512xf32, #tpu.memory_space<vmem>>, vector<64x512xf32>,
    return
  }
  func.func @transform_0(%arg0: i32, %arg1: i32) -> (i32, i32) {
    %c0_i32 = arith.constant 0 : i32
    return %arg0, %arg1 : i32, i32
  }
  func.func @transform_1(%arg0: i32, %arg1: i32) -> (i32, i32) {
    %c0_i32 = arith.constant 0 : i32
    %c0_i32_0 = arith.constant 0 : i32
    return %arg0, %c0_i32 : i32, i32
  }
  func.func @transform_2(%arg0: i32, %arg1: i32) -> (i32, i32) {
    %c0_i32 = arith.constant 0 : i32
    %c0_i32_0 = arith.constant 0 : i32
    return %arg0, %c0_i32 : i32, i32
  }
  func.func @transform_3(%arg0: i32, %arg1: i32) -> (i32, i32) {
    %c0_i32 = arith.constant 0 : i32
    return %arg0, %arg1 : i32, i32
  }
}

</mosaic_0001>

<llo_original>
// kernel: tpu_custom_call.1
$region0: #{tpu_custom_call.1}
  #allocation0 [shape = 'u32[]', space=smem, size = 0x4, offset = 0x4, fixed_abs, tag = 'smem constant byte address 0x4 - core index']
  #allocation1 [shape = 'u32[72,128]{1,0:T(1,128)}', space=vmem, size = 0x9000, scoped, tag = 'internal scratch']
  %s0 = inlined_call_operand.vmem [shape: s8[64,512], index: 0, kind: input, shape index: {}]
  %s1 = inlined_call_operand.vmem [shape: f32[64,1], index: 1, kind: input, shape index: {}]
  %s2 = inlined_call_operand.vmem [shape: f32[64,1], index: 2, kind: input, shape index: {}]
  %s3 = inlined_call_operand.hbm [shape: f32[64,512], index: 3, kind: output, shape index: {}]
  %s4 = sld [smem:[#allocation0]]
  $region22: #{tpu_custom_call.1} parent=0
    _
  %s6 = ssub.s32 1, %s4
  %s7 = scalar_select 0, %s6, %s4
  $region1: #{tpu_custom_call.1} parent=0
    #allocation2 [shape = 'u8[131072]{0}', space=vmem, size = 0x20000, scoped, tag = 'output window, operand 0, single buffered']
    #allocation3 [shape = 's32[1]{0}', space=sflag, size = 0x4, scoped, tag = 'scoped memory for tpu_custom_call.1']
    %8 = vsyncpa [#allocation3], 0
    // Predicated region
    $region2: #{tpu_custom_call.1} parent=1 // pred_check
      _
    $region3: #{tpu_custom_call.1} parent=1 // pred_check_branch
      %10 = sbr.rel (0) target = $region5
    $region4: #{tpu_custom_call.1} parent=1 // pred_region
      _
    $region5: #{tpu_custom_call.1} parent=1 // pred_fallthru
      _
    // Predicated region
    $region6: #{tpu_custom_call.1} parent=1 // pred_check
      _
    $region7: #{tpu_custom_call.1} parent=1 // pred_check_branch
      %12 = sbr.rel (0) target = $region9
    $region8: #{tpu_custom_call.1} parent=1 // pred_region
      _
    $region9: #{tpu_custom_call.1} parent=1 // pred_fallthru
      _
    // Predicated region
    $region10: #{tpu_custom_call.1} parent=1 // pred_check
      _
    $region11: #{tpu_custom_call.1} parent=1 // pred_check_branch
      %14 = sbr.rel (0) target = $region13
    $region12: #{tpu_custom_call.1} parent=1 // pred_region
      _
    $region13: #{tpu_custom_call.1} parent=1 // pred_fallthru
      _
    %v15 = vld [vmem:[%s0] sm:$0xff]
    %v16 = vld [vmem:[%s0 + $0x8] sm:$0xff]
    %v17 = vld [vmem:[%s0 + $0x10] sm:$0xff]
    %v18 = vld [vmem:[%s0 + $0x18] sm:$0xff]
    %v19 = vld [vmem:[%s0 + $0x20] sm:$0xff]
    %v20 = vld [vmem:[%s0 + $0x28] sm:$0xff]
    %v21 = vld [vmem:[%s0 + $0x30] sm:$0xff]
    %v22 = vld [vmem:[%s0 + $0x38] sm:$0xff]
    %v23 = vunpack.c.0.s8 %v15
    %v24 = vunpack.c.0.s8 %v16
    %v25 = vunpack.c.0.s8 %v17
    %v26 = vunpack.c.0.s8 %v18
    %v27 = vunpack.c.1.s8 %v15
    %v28 = vunpack.c.1.s8 %v16
    %v29 = vunpack.c.1.s8 %v17
    %v30 = vunpack.c.1.s8 %v18
    %v31 = vunpack.c.2.s8 %v15
    %v32 = vunpack.c.2.s8 %v16
    %v33 = vunpack.c.2.s8 %v17
    %v34 = vunpack.c.2.s8 %v18
    %v35 = vunpack.c.3.s8 %v15
    %v36 = vunpack.c.3.s8 %v16
    %v37 = vunpack.c.3.s8 %v17
    %v38 = vunpack.c.3.s8 %v18
    %v39 = vunpack.c.0.s8 %v19
    %v40 = vunpack.c.0.s8 %v20
    %v41 = vunpack.c.0.s8 %v21
    %v42 = vunpack.c.0.s8 %v22
    %v43 = vunpack.c.1.s8 %v19
    %v44 = vunpack.c.1.s8 %v20
    %v45 = vunpack.c.1.s8 %v21
    %v46 = vunpack.c.1.s8 %v22
    %v47 = vunpack.c.2.s8 %v19
    %v48 = vunpack.c.2.s8 %v20
    %v49 = vunpack.c.2.s8 %v21
    %v50 = vunpack.c.2.s8 %v22
    %v51 = vunpack.c.3.s8 %v19
    %v52 = vunpack.c.3.s8 %v20
    %v53 = vunpack.c.3.s8 %v21
    %v54 = vunpack.c.3.s8 %v22
    %v55 = vcvt.s32.f32 %v23
    %v56 = vcvt.s32.f32 %v24
    %v57 = vcvt.s32.f32 %v25
    %v58 = vcvt.s32.f32 %v26
    %v59 = vcvt.s32.f32 %v27
    %v60 = vcvt.s32.f32 %v28
    %v61 = vcvt.s32.f32 %v29
    %v62 = vcvt.s32.f32 %v30
    %v63 = vcvt.s32.f32 %v31
    %v64 = vcvt.s32.f32 %v32
    %v65 = vcvt.s32.f32 %v33
    %v66 = vcvt.s32.f32 %v34
    %v67 = vcvt.s32.f32 %v35
    %v68 = vcvt.s32.f32 %v36
    %v69 = vcvt.s32.f32 %v37
    %v70 = vcvt.s32.f32 %v38
    %v71 = vcvt.s32.f32 %v39
    %v72 = vcvt.s32.f32 %v40
    %v73 = vcvt.s32.f32 %v41
    %v74 = vcvt.s32.f32 %v42
    %v75 = vcvt.s32.f32 %v43
    %v76 = vcvt.s32.f32 %v44
    %v77 = vcvt.s32.f32 %v45
    %v78 = vcvt.s32.f32 %v46
    %v79 = vcvt.s32.f32 %v47
    %v80 = vcvt.s32.f32 %v48
    %v81 = vcvt.s32.f32 %v49
    %v82 = vcvt.s32.f32 %v50
    %v83 = vcvt.s32.f32 %v51
    %v84 = vcvt.s32.f32 %v52
    %v85 = vcvt.s32.f32 %v53
    %v86 = vcvt.s32.f32 %v54
    %v87 = vld [vmem:[%s2] sm:$0xff]
    %v88 = vld [vmem:[%s2 + $0x8] sm:$0xff]
    %v89 = vld [vmem:[%s2 + $0x10] sm:$0xff]
    %v90 = vld [vmem:[%s2 + $0x18] sm:$0xff]
    %v91 = vld [vmem:[%s2 + $0x20] sm:$0xff]
    %v92 = vld [vmem:[%s2 + $0x28] sm:$0xff]
    %v93 = vld [vmem:[%s2 + $0x30] sm:$0xff]
    %v94 = vld [vmem:[%s2 + $0x38] sm:$0xff]
    %96 = vset.pattern.permute.xlu0 0
    %97 = vperm.xlu0 %96, %v87
    %v98 = vpop.permute.xlu0 %97
    %101 = vset.pattern.permute.xlu0 0
    %102 = vperm.xlu0 %101, %v88
    %v103 = vpop.permute.xlu0 %102
    %106 = vset.pattern.permute.xlu0 0
    %107 = vperm.xlu0 %106, %v89
    %v108 = vpop.permute.xlu0 %107
    %111 = vset.pattern.permute.xlu0 0
    %112 = vperm.xlu0 %111, %v90
    %v113 = vpop.permute.xlu0 %112
    %116 = vset.pattern.permute.xlu0 0
    %117 = vperm.xlu0 %116, %v91
    %v118 = vpop.permute.xlu0 %117
    %121 = vset.pattern.permute.xlu0 0
    %122 = vperm.xlu0 %121, %v92
    %v123 = vpop.permute.xlu0 %122
    %126 = vset.pattern.permute.xlu0 0
    %127 = vperm.xlu0 %126, %v93
    %v128 = vpop.permute.xlu0 %127
    %131 = vset.pattern.permute.xlu0 0
    %132 = vperm.xlu0 %131, %v94
    %v133 = vpop.permute.xlu0 %132
    %v135 = vsub.f32 %v55, %v98
    %v136 = vsub.f32 %v56, %v98
    %v137 = vsub.f32 %v57, %v98
    %v138 = vsub.f32 %v58, %v98
    %v139 = vsub.f32 %v59, %v103
    %v140 = vsub.f32 %v60, %v103
    %v141 = vsub.f32 %v61, %v103
    %v142 = vsub.f32 %v62, %v103
    %v143 = vsub.f32 %v63, %v108
    %v144 = vsub.f32 %v64, %v108
    %v145 = vsub.f32 %v65, %v108
    %v146 = vsub.f32 %v66, %v108
    %v147 = vsub.f32 %v67, %v113
    %v148 = vsub.f32 %v68, %v113
    %v149 = vsub.f32 %v69, %v113
    %v150 = vsub.f32 %v70, %v113
    %v151 = vsub.f32 %v71, %v118
    %v152 = vsub.f32 %v72, %v118
    %v153 = vsub.f32 %v73, %v118
    %v154 = vsub.f32 %v74, %v118
    %v155 = vsub.f32 %v75, %v123
    %v156 = vsub.f32 %v76, %v123
    %v157 = vsub.f32 %v77, %v123
    %v158 = vsub.f32 %v78, %v123
    %v159 = vsub.f32 %v79, %v128
    %v160 = vsub.f32 %v80, %v128
    %v161 = vsub.f32 %v81, %v128
    %v162 = vsub.f32 %v82, %v128
    %v163 = vsub.f32 %v83, %v133
    %v164 = vsub.f32 %v84, %v133
    %v165 = vsub.f32 %v85, %v133
    %v166 = vsub.f32 %v86, %v133
    %v167 = vld [vmem:[%s1] sm:$0xff]
    %v168 = vld [vmem:[%s1 + $0x8] sm:$0xff]
    %v169 = vld [vmem:[%s1 + $0x10] sm:$0xff]
    %v170 = vld [vmem:[%s1 + $0x18] sm:$0xff]
    %v171 = vld [vmem:[%s1 + $0x20] sm:$0xff]
    %v172 = vld [vmem:[%s1 + $0x28] sm:$0xff]
    %v173 = vld [vmem:[%s1 + $0x30] sm:$0xff]
    %v174 = vld [vmem:[%s1 + $0x38] sm:$0xff]
    %176 = vset.pattern.permute.xlu0 0
    %177 = vperm.xlu0 %176, %v167
    %v178 = vpop.permute.xlu0 %177
    %181 = vset.pattern.permute.xlu0 0
    %182 = vperm.xlu0 %181, %v168
    %v183 = vpop.permute.xlu0 %182
    %186 = vset.pattern.permute.xlu0 0
    %187 = vperm.xlu0 %186, %v169
    %v188 = vpop.permute.xlu0 %187
    %191 = vset.pattern.permute.xlu0 0
    %192 = vperm.xlu0 %191, %v170
    %v193 = vpop.permute.xlu0 %192
    %196 = vset.pattern.permute.xlu0 0
    %197 = vperm.xlu0 %196, %v171
    %v198 = vpop.permute.xlu0 %197
    %201 = vset.pattern.permute.xlu0 0
    %202 = vperm.xlu0 %201, %v172
    %v203 = vpop.permute.xlu0 %202
    %206 = vset.pattern.permute.xlu0 0
    %207 = vperm.xlu0 %206, %v173
    %v208 = vpop.permute.xlu0 %207
    %211 = vset.pattern.permute.xlu0 0
    %212 = vperm.xlu0 %211, %v174
    %v213 = vpop.permute.xlu0 %212
    %v215 = vmul.f32 %v135, %v178
    %v216 = vmul.f32 %v136, %v178
    %v217 = vmul.f32 %v137, %v178
    %v218 = vmul.f32 %v138, %v178
    %v219 = vmul.f32 %v139, %v183
    %v220 = vmul.f32 %v140, %v183
    %v221 = vmul.f32 %v141, %v183
    %v222 = vmul.f32 %v142, %v183
    %v223 = vmul.f32 %v143, %v188
    %v224 = vmul.f32 %v144, %v188
    %v225 = vmul.f32 %v145, %v188
    %v226 = vmul.f32 %v146, %v188
    %v227 = vmul.f32 %v147, %v193
    %v228 = vmul.f32 %v148, %v193
    %v229 = vmul.f32 %v149, %v193
    %v230 = vmul.f32 %v150, %v193
    %v231 = vmul.f32 %v151, %v198
    %v232 = vmul.f32 %v152, %v198
    %v233 = vmul.f32 %v153, %v198
    %v234 = vmul.f32 %v154, %v198
    %v235 = vmul.f32 %v155, %v203
    %v236 = vmul.f32 %v156, %v203
    %v237 = vmul.f32 %v157, %v203
    %v238 = vmul.f32 %v158, %v203
    %v239 = vmul.f32 %v159, %v208
    %v240 = vmul.f32 %v160, %v208
    %v241 = vmul.f32 %v161, %v208
    %v242 = vmul.f32 %v162, %v208
    %v243 = vmul.f32 %v163, %v213
    %v244 = vmul.f32 %v164, %v213
    %v245 = vmul.f32 %v165, %v213
    %v246 = vmul.f32 %v166, %v213
    %247 = vst [vmem:[#allocation2] sm:$0xff] %v215
    %248 = vst [vmem:[#allocation2 + $0x8] sm:$0xff] %v216
    %249 = vst [vmem:[#allocation2 + $0x10] sm:$0xff] %v217
    %250 = vst [vmem:[#allocation2 + $0x18] sm:$0xff] %v218
    %251 = vst [vmem:[#allocation2 + $0x20] sm:$0xff] %v219
    %252 = vst [vmem:[#allocation2 + $0x28] sm:$0xff] %v220
    %253 = vst [vmem:[#allocation2 + $0x30] sm:$0xff] %v221
    %254 = vst [vmem:[#allocation2 + $0x38] sm:$0xff] %v222
    %255 = vst [vmem:[#allocation2 + $0x40] sm:$0xff] %v223
    %256 = vst [vmem:[#allocation2 + $0x48] sm:$0xff] %v224
    %257 = vst [vmem:[#allocation2 + $0x50] sm:$0xff] %v225
    %258 = vst [vmem:[#allocation2 + $0x58] sm:$0xff] %v226
    %259 = vst [vmem:[#allocation2 + $0x60] sm:$0xff] %v227
    %260 = vst [vmem:[#allocation2 + $0x68] sm:$0xff] %v228
    %261 = vst [vmem:[#allocation2 + $0x70] sm:$0xff] %v229
    %262 = vst [vmem:[#allocation2 + $0x78] sm:$0xff] %v230
    %263 = vst [vmem:[#allocation2 + $0x80] sm:$0xff] %v231
    %264 = vst [vmem:[#allocation2 + $0x88] sm:$0xff] %v232
    %265 = vst [vmem:[#allocation2 + $0x90] sm:$0xff] %v233
    %266 = vst [vmem:[#allocation2 + $0x98] sm:$0xff] %v234
    %267 = vst [vmem:[#allocation2 + $0xa0] sm:$0xff] %v235
    %268 = vst [vmem:[#allocation2 + $0xa8] sm:$0xff] %v236
    %269 = vst [vmem:[#allocation2 + $0xb0] sm:$0xff] %v237
    %270 = vst [vmem:[#allocation2 + $0xb8] sm:$0xff] %v238
    %271 = vst [vmem:[#allocation2 + $0xc0] sm:$0xff] %v239
    %272 = vst [vmem:[#allocation2 + $0xc8] sm:$0xff] %v240
    %273 = vst [vmem:[#allocation2 + $0xd0] sm:$0xff] %v241
    %274 = vst [vmem:[#allocation2 + $0xd8] sm:$0xff] %v242
    %275 = vst [vmem:[#allocation2 + $0xe0] sm:$0xff] %v243
    %276 = vst [vmem:[#allocation2 + $0xe8] sm:$0xff] %v244
    %277 = vst [vmem:[#allocation2 + $0xf0] sm:$0xff] %v245
    %278 = vst [vmem:[#allocation2 + $0xf8] sm:$0xff] %v246
    // Predicated region
    $region14: #{tpu_custom_call.1} parent=1 // pred_check
      _
    $region15: #{tpu_custom_call.1} parent=1 // pred_check_branch
      %280 = sbr.rel (0) target = $region17
    $region16: #{tpu_custom_call.1} parent=1 // pred_region
      %282 = vsyncadd [#allocation3], 0
      %s283 = sshll.u32 [#allocation2], 4
      %s284 = int_to_ptr.vmem [resolvable:$true] %s283
      %s285 = sshll.u32 %s3, 4
      %s286 = int_to_ptr.hbm [resolvable:$true] %s285
      %291 = dma.vmem_to_hbm [thread:$0]  %s284, 4096, %s286, [#allocation3], 512, 512, 32
    $region17: #{tpu_custom_call.1} parent=1 // pred_fallthru
      _
    // Predicated region
    $region18: #{tpu_custom_call.1} parent=1 // pred_check
      _
    $region19: #{tpu_custom_call.1} parent=1 // pred_check_branch
      %293 = sbr.rel (0) target = $region21
    $region20: #{tpu_custom_call.1} parent=1 // pred_region
      %295 = dma.done [#allocation3], 4096
    $region21: #{tpu_custom_call.1} parent=1 // pred_fallthru
      _
    %296 = vsyncpa [#allocation3], 1

</llo_original>
